<compile_context>
chip_gen: v7x
topology: tpu7x:2x2x1
jax: 0.10.0
libtpu: 0.0.40
codegen_flags: <defaults>
</compile_context>

<pallas_src>
import functools

import jax
import jax.numpy as jnp
from jax.experimental import pallas as pl
from jax.experimental.pallas import tpu as pltpu

_LANE = 128
_SUBLANE = 8
_RESIDENT_W_BYTES = 8 << 20   # keep whole weight stack in VMEM below this
_VMEM_HEADROOM = 2 << 20


def _round_up(x, m):
    return ((x + m - 1) // m) * m


def _default_tile_n():
    """Per-generation batch-tile default (256-multiple for 256-wide MXUs)."""
    try:
        kind = jax.devices()[0].device_kind.lower()
    except Exception:
        return 512
    if "v5 lite" in kind or "v5e" in kind or "v5litepod" in kind:
        return 256        # 4x128^2 MXU; 256 rows amortize per-step overhead
    return 512            # v6e / v7x: 2x256^2 MXU wants 256-multiple LHS


def _resnet_kernel(K, resident_w, x_ref, w_ref, b_ref, wc_ref, bc_ref, h_ref,
                   pred_ref, class_ref, trans_ref, x_scratch):
    """One (batch-tile, layer) grid step.

    x_ref:     (TILE_N, Dp)            bf16  flattened input rows (read at layer 0)
    w_ref:     (L+1|1, Dp, Dp)         bf16  resident stack or this layer's weight,
                                             pre-transposed (in, out)
    b_ref:     (1, 1, Dp)              f32   this layer's bias (zeros for layer 0)
    wc_ref:    (Dp, Kp)                bf16  classifier weight, pre-transposed
    bc_ref:    (1, Kp)                 f32   classifier bias (zero-padded)
    h_ref:     (1,) SMEM               f32   Euler step size h
    pred_ref:  (TILE_N, Kp)            f32   softmax output   (written at last layer)
    class_ref: (TILE_N, Kp)            f32   logits           (written at last layer)
    trans_ref: (1, TILE_N, Dp)         bf16  per-layer feature slab (written every step)
    x_scratch: (TILE_N, Dp)            f32   carried activation (persistent VMEM)
    """
    l = pl.program_id(1)
    last = pl.num_programs(1) - 1
    h = h_ref[0]
    # Resident stack: dynamic-index the layer; streamed: block index_map already
    # selected layer l, so the block's leading dim is 0.
    w = w_ref[l] if resident_w else w_ref[0]       # (Dp, Dp) bf16

    @pl.when(l == 0)
    def _():
        # Input layer (space augmentation): X @ W0^T, no bias, no relu.
        x_scratch[...] = jnp.dot(x_ref[...], w,
                                 preferred_element_type=jnp.float32)

    @pl.when(l > 0)
    def _():
        # Euler / residual step: x <- x + h * relu(x @ W_l^T + b_l).
        x = x_scratch[...]
        z = jnp.dot(x.astype(w.dtype), w,
                    preferred_element_type=jnp.float32) + b_ref[0]
        x_scratch[...] = x + h * jnp.maximum(z, 0.0)

    # Per-layer feature writeback (lane-dense bf16 block -> HBM each step).
    trans_ref[0] = x_scratch[...].astype(trans_ref.dtype)

    @pl.when(l == last)
    def _():
        # Classifier + softmax hypothesis. Padded K lanes carry zero
        # weight/bias and are masked out of the softmax.
        x = x_scratch[...]
        logits = jnp.dot(x.astype(wc_ref.dtype), wc_ref[...],
                         preferred_element_type=jnp.float32) + bc_ref[...]
        class_ref[...] = logits
        col = jax.lax.broadcasted_iota(jnp.int32, logits.shape, 1)
        masked = jnp.where(col < K, logits, jnp.finfo(jnp.float32).min)
        m = jnp.max(masked, axis=1, keepdims=True)
        e = jnp.exp(masked - m)
        # Exact divide: predicted rows sum to 1 (runs once per batch tile).
        pred_ref[...] = e / jnp.sum(e, axis=1, keepdims=True)


def resnet_forward(X, W0, Ws, bs, Wc, bc, h, *, tile_n=None,
                   transpose_features=False):
    """Flatten input, pack/pad parameters, call the Pallas kernel.

    X  : (N, C, n, n)  image batch (NCHW)
    W0 : (D, D)        PyTorch-layout (out, in) input-layer weight
    Ws : (L, D, D)     PyTorch-layout residual-layer weights
    bs : (L, D)        residual-layer biases
    Wc : (K, D)        classifier weight (out, in)
    bc : (K,)          classifier bias
    h  : float         Euler step size

    Returns (X_predicted, X_classified, features) where features is the
    lane-dense bf16 slab of shape (L+1, N, D) by default, or PyTorch's
    (N, D, L+1) layout when transpose_features=True (costs an extra HBM
    relayout with a lane-hostile last dim — avoid unless required).

    NOTE: in a training/serving loop the parameter packing below (transpose,
    pad, bf16 cast) should be done once at parameter-load time, not per call.
    """
    N = X.shape[0]
    L, D, _ = Ws.shape
    K = Wc.shape[0]

    Dp = _round_up(D, _LANE)
    Kp = _round_up(K, _LANE)
    if tile_n is None:
        tile_n = _default_tile_n()
    tile_n = min(tile_n, _round_up(N, _SUBLANE))
    tile_n = _round_up(tile_n, _SUBLANE)
    Np = _round_up(N, tile_n)
    n_bt = Np // tile_n           # (on v7x, prefer n_bt even so both TCs work)
    n_layers = L + 1              # input layer + L residual layers

    # Hold the whole weight stack resident in VMEM when it is small.
    resident_w = (n_layers * Dp * Dp * 2) <= _RESIDENT_W_BYTES

    # Input: flatten, zero-pad to (Np, Dp), bf16 for the MXU.
    x2 = X.reshape(N, D).astype(jnp.float32)
    x2 = jnp.pad(x2, ((0, Np - N), (0, Dp - D))).astype(jnp.bfloat16)

    # Stack input layer + residual layers: (L+1, D, D) -> (in, out) -> padded bf16.
    w_all = jnp.concatenate(
        [jnp.asarray(W0, jnp.float32)[None], jnp.asarray(Ws, jnp.float32)], axis=0)
    w_all = jnp.transpose(w_all, (0, 2, 1))
    w_all = jnp.pad(w_all, ((0, 0), (0, Dp - D), (0, Dp - D))).astype(jnp.bfloat16)

    # Biases: zeros for the (bias-free) input layer, f32, padded.
    b_all = jnp.concatenate(
        [jnp.zeros((1, D), jnp.float32), jnp.asarray(bs, jnp.float32)], axis=0)
    b_all = jnp.pad(b_all, ((0, 0), (0, Dp - D))).reshape(n_layers, 1, Dp)

    # Classifier: pre-transposed, padded to lane-dense Kp columns.
    wc_t = jnp.pad(jnp.asarray(Wc, jnp.float32).T,
                   ((0, Dp - D), (0, Kp - K))).astype(jnp.bfloat16)
    bc_r = jnp.pad(jnp.asarray(bc, jnp.float32), (0, Kp - K)).reshape(1, Kp)
    h_arr = jnp.reshape(jnp.asarray(h, jnp.float32), (1,))

    # Explicit VMEM budget (double-buffered blocks + persistent scratch).
    w_block_bytes = (n_layers if resident_w else 1) * Dp * Dp * 2
    vmem_bytes = (
        2 * w_block_bytes                  # layer weights
        + 2 * tile_n * Dp * 2              # x input (bf16)
        + 2 * Dp * 4                       # layer bias block
        + 2 * (Dp * Kp * 2 + Kp * 4)       # classifier W/b
        + 2 * 2 * tile_n * Kp * 4          # pred + logits (f32)
        + 2 * tile_n * Dp * 2              # feature slab out (bf16)
        + tile_n * Dp * 4                  # carried activation scratch
        + _VMEM_HEADROOM
    )
    vmem_limit = int(min(max(vmem_bytes, 32 << 20), 64 << 20))

    if resident_w:
        w_spec = pl.BlockSpec((n_layers, Dp, Dp), lambda i, l: (0, 0, 0))
    else:
        w_spec = pl.BlockSpec((1, Dp, Dp), lambda i, l: (l, 0, 0))

    grid = (n_bt, n_layers)

    pred, logits, trans = pl.pallas_call(
        functools.partial(_resnet_kernel, K, resident_w),
        out_shape=(
            jax.ShapeDtypeStruct((Np, Kp), jnp.float32),              # X_predicted
            jax.ShapeDtypeStruct((Np, Kp), jnp.float32),              # X_classified
            jax.ShapeDtypeStruct((n_layers, Np, Dp), jnp.bfloat16),   # features/layer
        ),
        grid_spec=pltpu.PrefetchScalarGridSpec(
            num_scalar_prefetch=0,
            grid=grid,
            in_specs=[
                pl.BlockSpec((tile_n, Dp), lambda i, l: (i, 0)),      # x (batch tile)
                w_spec,                                               # layer weight(s)
                pl.BlockSpec((1, 1, Dp), lambda i, l: (l, 0, 0)),     # layer bias
                pl.BlockSpec((Dp, Kp), lambda i, l: (0, 0)),          # classifier W
                pl.BlockSpec((1, Kp), lambda i, l: (0, 0)),           # classifier b
                pl.BlockSpec(memory_space=pltpu.MemorySpace.SMEM),    # h
            ],
            out_specs=(
                pl.BlockSpec((tile_n, Kp), lambda i, l: (i, 0)),      # pred
                pl.BlockSpec((tile_n, Kp), lambda i, l: (i, 0)),      # logits
                pl.BlockSpec((1, tile_n, Dp), lambda i, l: (l, i, 0)),  # features
            ),
            scratch_shapes=[pltpu.VMEM((tile_n, Dp), jnp.float32)],   # carried x
        ),
        compiler_params=pltpu.CompilerParams(
            dimension_semantics=("parallel", "arbitrary"),
            vmem_limit_bytes=vmem_limit),
    )(x2, w_all, b_all, wc_t, bc_r, h_arr)

    pred = pred[:N, :K]
    logits = logits[:N, :K]
    features = trans[:, :N, :D]                   # lane-dense (L+1, N, D) bf16
    if transpose_features:
        # PyTorch X_transformed layout (N, D, L+1); lane-hostile, opt-in only.
        features = jnp.transpose(features.astype(jnp.float32), (1, 2, 0))
    return pred, logits, features


def _reference_forward(X, W0, Ws, bs, Wc, bc, h):
    """Plain-JAX f32 reference mirroring the PyTorch forward."""
    N = X.shape[0]
    L, D, _ = Ws.shape
    x = X.reshape(N, D).astype(jnp.float32)
    feats = []
    x = x @ W0.T
    feats.append(x)
    for i in range(L):
        z = x @ Ws[i].T + bs[i]
        x = x + h * jnp.maximum(z, 0.0)
        feats.append(x)
    logits = x @ Wc.T + bc
    pred = jax.nn.softmax(logits, axis=1)
    trans = jnp.stack(feats, axis=-1)  # (N, D, L+1)
    return pred, logits, trans


if __name__ == "__main__":
    # Small MNIST-like configuration:
    #   n_channels = 1, image n x n with n = 16 -> image_dimension = 256
    #   D = image_dimension * n_channels = 256, L = 4 layers, K = 10 classes
    N, C, n = 8, 1, 16
    D = C * n * n
    L = 4
    K = 10
    h = 1.0 / L  # trainable stepsize initialized to 1/L

    key = jax.random.PRNGKey(0)
    kx, k0, kw, kb, kc, kbc = jax.random.split(key, 6)

    X = jax.random.normal(kx, (N, C, n, n), dtype=jnp.float32)
    W0 = jax.random.normal(k0, (D, D), dtype=jnp.float32) / jnp.sqrt(D)
    Ws = jax.random.normal(kw, (L, D, D), dtype=jnp.float32) / jnp.sqrt(D)
    bs = jax.random.normal(kb, (L, D), dtype=jnp.float32) / jnp.sqrt(D)
    Wc = jax.random.normal(kc, (K, D), dtype=jnp.float32) / jnp.sqrt(D)
    bc = jax.random.normal(kbc, (K,), dtype=jnp.float32) / jnp.sqrt(D)

    fwd = jax.jit(resnet_forward)
    pred, logits, feats = fwd(X, W0, Ws, bs, Wc, bc, h)
    jax.block_until_ready((pred, logits, feats))

    # Verify against a plain-JAX f32 reference. Tolerances are relaxed because
    # the kernel runs its matmuls in bf16 on the MXU (f32 accumulation) and
    # stores the per-layer feature slab in bf16.
    rpred, rlogits, rtrans = _reference_forward(X, W0, Ws, bs, Wc, bc, h)
    assert pred.shape == (N, K) and logits.shape == (N, K)
    assert feats.shape == (L + 1, N, D)
    feats_ncl = jnp.transpose(feats.astype(jnp.float32), (1, 2, 0))  # (N, D, L+1)
    assert jnp.allclose(logits, rlogits, atol=5e-2, rtol=5e-2)
    assert jnp.allclose(feats_ncl, rtrans, atol=6e-2, rtol=6e-2)
    assert jnp.allclose(pred, rpred, atol=5e-2)

    print("KERNEL_OK")
</pallas_src>

<mosaic_0001>
module attributes {stable_mosaic.version = 11 : i64} {
  func.func @_resnet_kernel(%arg0: i32, %arg1: i32, %arg2: memref<8x256xbf16, #tpu.memory_space<vmem>>, %arg3: memref<5x256x256xbf16, #tpu.memory_space<vmem>>, %arg4: memref<1x1x256xf32, #tpu.memory_space<vmem>>, %arg5: memref<256x128xbf16, #tpu.memory_space<vmem>>, %arg6: memref<1x128xf32, #tpu.memory_space<vmem>>, %arg7: memref<1xf32, #tpu.memory_space<smem>>, %arg8: memref<8x128xf32, #tpu.memory_space<vmem>>, %arg9: memref<8x128xf32, #tpu.memory_space<vmem>>, %arg10: memref<1x8x256xbf16, #tpu.memory_space<vmem>>, %arg11: memref<8x256xf32, #tpu.memory_space<vmem>>) attributes {dimension_semantics = [#tpu.dimension_semantics<parallel>, #tpu.dimension_semantics<arbitrary>], iteration_bounds = array<i64: 1, 5>, scalar_prefetch = 0 : i64, scratch_operands = 1 : i64, tpu.core_type = #tpu.core_type<tc>, window_params = [{transform_indices = @transform_0, window_bounds = array<i64: 8, 256>}, {pipeline_mode = #tpu.pipeline_mode<synchronous>, transform_indices = @transform_1, window_bounds = array<i64: 5, 256, 256>}, {transform_indices = @transform_2, window_bounds = array<i64: 1, 1, 256>}, {pipeline_mode = #tpu.pipeline_mode<synchronous>, transform_indices = @transform_3, window_bounds = array<i64: 256, 128>}, {pipeline_mode = #tpu.pipeline_mode<synchronous>, transform_indices = @transform_4, window_bounds = array<i64: 1, 128>}, {transform_indices = @transform_5, window_bounds = array<i64: 1>}, {transform_indices = @transform_6, window_bounds = array<i64: 8, 128>}, {transform_indices = @transform_7, window_bounds = array<i64: 8, 128>}, {transform_indices = @transform_8, window_bounds = array<i64: 1, 8, 256>}]} {
    %c0 = arith.constant 0 : index
    %0 = memref.load %arg7[%c0] : memref<1xf32, #tpu.memory_space<smem>>
    %1 = arith.index_cast %arg1 : i32 to index
    %c0_0 = arith.constant 0 : index
    %c0_1 = arith.constant 0 : index
    %2 = vector.load %arg3[%1, %c0_0, %c0_1] : memref<5x256x256xbf16, #tpu.memory_space<vmem>>, vector<1x256x256xbf16>
    %3 = vector.shape_cast %2 : vector<1x256x256xbf16> to vector<256x256xbf16>
    %c0_i32 = arith.constant 0 : i32
    %4 = arith.cmpi eq, %arg1, %c0_i32 : i32
    %5 = arith.extui %4 : i1 to i32
    %c0_i32_2 = arith.constant 0 : i32
    %6 = arith.cmpi ne, %5, %c0_i32_2 : i32
    scf.if %6 {
      %c0_11 = arith.constant 0 : index
      %c0_12 = arith.constant 0 : index
      %18 = vector.load %arg2[%c0_11, %c0_12] : memref<8x256xbf16, #tpu.memory_space<vmem>>, vector<8x256xbf16>
      %cst = arith.constant dense<0.000000e+00> : vector<8x256xf32>
      %19 = tpu.matmul %18, %3, %cst {dimension_numbers = #tpu.dot_dimension_numbers<[1], [0], [0], [1], [0, 0, 1, 1], [], []>} : vector<8x256xbf16>, vector<256x256xbf16>, vector<8x256xf32> -> vector<8x256xf32>
      %c0_13 = arith.constant 0 : index
      %c0_14 = arith.constant 0 : index
      %20 = vector.load %arg11[%c0_13, %c0_14] : memref<8x256xf32, #tpu.memory_space<vmem>>, vector<8x256xf32>
      tpu.vector_store %arg11[%c0_13, %c0_14], %19 {strides = array<i32>} : memref<8x256xf32, #tpu.memory_space<vmem>>, vector<8x256xf32>,
    } else {
    }
    %c0_i32_3 = arith.constant 0 : i32
    %7 = arith.cmpi sgt, %arg1, %c0_i32_3 : i32
    %8 = arith.extui %7 : i1 to i32
    %c0_i32_4 = arith.constant 0 : i32
    %9 = arith.cmpi ne, %8, %c0_i32_4 : i32
    scf.if %9 {
      %c0_11 = arith.constant 0 : index
      %c0_12 = arith.constant 0 : index
      %18 = vector.load %arg11[%c0_11, %c0_12] : memref<8x256xf32, #tpu.memory_space<vmem>>, vector<8x256xf32>
      %19 = arith.truncf %18 : vector<8x256xf32> to vector<8x256xbf16>
      %cst = arith.constant dense<0.000000e+00> : vector<8x256xf32>
      %20 = tpu.matmul %19, %3, %cst {dimension_numbers = #tpu.dot_dimension_numbers<[1], [0], [0], [1], [0, 0, 1, 1], [], []>} : vector<8x256xbf16>, vector<256x256xbf16>, vector<8x256xf32> -> vector<8x256xf32>
      %c0_13 = arith.constant 0 : index
      %c0_14 = arith.constant 0 : index
      %c0_15 = arith.constant 0 : index
      %21 = vector.load %arg4[%c0_13, %c0_14, %c0_15] : memref<1x1x256xf32, #tpu.memory_space<vmem>>, vector<1x1x256xf32>
      %22 = vector.shape_cast %21 : vector<1x1x256xf32> to vector<1x256xf32>
      %23 = vector.broadcast %22 : vector<1x256xf32> to vector<8x256xf32>
      %24 = arith.addf %20, %23 : vector<8x256xf32>
      %cst_16 = arith.constant 0.000000e+00 : f32
      %25 = vector.broadcast %cst_16 : f32 to vector<8x256xf32>
      %26 = arith.maximumf %24, %25 : vector<8x256xf32>
      %27 = vector.broadcast %0 : f32 to vector<8x256xf32>
      %28 = arith.mulf %27, %26 : vector<8x256xf32>
      %29 = arith.addf %18, %28 : vector<8x256xf32>
      %c0_17 = arith.constant 0 : index
      %c0_18 = arith.constant 0 : index
      %30 = vector.load %arg11[%c0_17, %c0_18] : memref<8x256xf32, #tpu.memory_space<vmem>>, vector<8x256xf32>
      tpu.vector_store %arg11[%c0_17, %c0_18], %29 {strides = array<i32>} : memref<8x256xf32, #tpu.memory_space<vmem>>, vector<8x256xf32>,
    } else {
    }
    %c0_5 = arith.constant 0 : index
    %c0_6 = arith.constant 0 : index
    %10 = vector.load %arg11[%c0_5, %c0_6] : memref<8x256xf32, #tpu.memory_space<vmem>>, vector<8x256xf32>
    %11 = arith.truncf %10 : vector<8x256xf32> to vector<8x256xbf16>
    %c0_7 = arith.constant 0 : index
    %c0_8 = arith.constant 0 : index
    %c0_9 = arith.constant 0 : index
    %12 = vector.load %arg10[%c0_7, %c0_8, %c0_9] : memref<1x8x256xbf16, #tpu.memory_space<vmem>>, vector<1x8x256xbf16>
    %13 = vector.shape_cast %12 : vector<1x8x256xbf16> to vector<8x256xbf16>
    %14 = vector.shape_cast %11 : vector<8x256xbf16> to vector<1x8x256xbf16>
    tpu.vector_store %arg10[%c0_7, %c0_8, %c0_9], %14 {strides = array<i32>} : memref<1x8x256xbf16, #tpu.memory_space<vmem>>, vector<1x8x256xbf16>,
    %c4_i32 = arith.constant 4 : i32
    %15 = arith.cmpi eq, %arg1, %c4_i32 : i32
    %16 = arith.extui %15 : i1 to i32
    %c0_i32_10 = arith.constant 0 : i32
    %17 = arith.cmpi ne, %16, %c0_i32_10 : i32
    scf.if %17 {
      %c0_11 = arith.constant 0 : index
      %c0_12 = arith.constant 0 : index
      %18 = vector.load %arg11[%c0_11, %c0_12] : memref<8x256xf32, #tpu.memory_space<vmem>>, vector<8x256xf32>
      %19 = arith.truncf %18 : vector<8x256xf32> to vector<8x256xbf16>
      %c0_13 = arith.constant 0 : index
      %c0_14 = arith.constant 0 : index
      %20 = vector.load %arg5[%c0_13, %c0_14] : memref<256x128xbf16, #tpu.memory_space<vmem>>, vector<256x128xbf16>
      %cst = arith.constant dense<0.000000e+00> : vector<8x128xf32>
      %21 = tpu.matmul %19, %20, %cst {dimension_numbers = #tpu.dot_dimension_numbers<[1], [0], [0], [1], [0, 0, 1, 1], [], []>} : vector<8x256xbf16>, vector<256x128xbf16>, vector<8x128xf32> -> vector<8x128xf32>
      %c0_15 = arith.constant 0 : index
      %c0_16 = arith.constant 0 : index
      %22 = vector.load %arg6[%c0_15, %c0_16] : memref<1x128xf32, #tpu.memory_space<vmem>>, vector<1x128xf32>
      %23 = vector.broadcast %22 : vector<1x128xf32> to vector<8x128xf32>
      %24 = arith.addf %21, %23 : vector<8x128xf32>
      %c0_17 = arith.constant 0 : index
      %c0_18 = arith.constant 0 : index
      %25 = vector.load %arg9[%c0_17, %c0_18] : memref<8x128xf32, #tpu.memory_space<vmem>>, vector<8x128xf32>
      tpu.vector_store %arg9[%c0_17, %c0_18], %24 {strides = array<i32>} : memref<8x128xf32, #tpu.memory_space<vmem>>, vector<8x128xf32>,
      %26 = tpu.iota {dimensions = array<i32: 1>} : vector<8x128xi32>
      %c10_i32 = arith.constant 10 : i32
      %27 = vector.broadcast %c10_i32 : i32 to vector<8x128xi32>
      %28 = arith.cmpi slt, %26, %27 : vector<8x128xi32>
      %cst_19 = arith.constant -3.40282347E+38 : f32
      %29 = vector.broadcast %cst_19 : f32 to vector<8x128xf32>
      %30 = arith.select %28, %24, %29 : vector<8x128xi1>, vector<8x128xf32>
      %cst_20 = arith.constant dense<0xFF800000> : vector<8xf32>
      %31 = vector.multi_reduction <maximumf>, %30, %cst_20 [1] : vector<8x128xf32> to vector<8xf32>
      %32 = vector.shape_cast %31 : vector<8xf32> to vector<8x1xf32>
      %33 = vector.broadcast %32 : vector<8x1xf32> to vector<8x128xf32>
      %34 = arith.subf %30, %33 : vector<8x128xf32>
      %35 = math.exp %34 : vector<8x128xf32>
      %cst_21 = arith.constant dense<0.000000e+00> : vector<8xf32>
      %36 = vector.multi_reduction <add>, %35, %cst_21 [1] : vector<8x128xf32> to vector<8xf32>
      %37 = vector.shape_cast %36 : vector<8xf32> to vector<8x1xf32>
      %38 = vector.broadcast %37 : vector<8x1xf32> to vector<8x128xf32>
      %39 = arith.divf %35, %38 : vector<8x128xf32>
      %c0_22 = arith.constant 0 : index
      %c0_23 = arith.constant 0 : index
      %40 = vector.load %arg8[%c0_22, %c0_23] : memref<8x128xf32, #tpu.memory_space<vmem>>, vector<8x128xf32>
      tpu.vector_store %arg8[%c0_22, %c0_23], %39 {strides = array<i32>} : memref<8x128xf32, #tpu.memory_space<vmem>>, vector<8x128xf32>,
    } else {
    }
    return
  }
  func.func @transform_0(%arg0: i32, %arg1: i32) -> (i32, i32) {
    %c0_i32 = arith.constant 0 : i32
    %c0_i32_0 = arith.constant 0 : i32
    return %arg0, %c0_i32 : i32, i32
  }
  func.func @transform_1(%arg0: i32, %arg1: i32) -> (i32, i32, i32) {
    %c0_i32 = arith.constant 0 : i32
    %c0_i32_0 = arith.constant 0 : i32
    %c0_i32_1 = arith.constant 0 : i32
    %c0_i32_2 = arith.constant 0 : i32
    return %c0_i32, %c0_i32_0, %c0_i32_1 : i32, i32, i32
  }
  func.func @transform_2(%arg0: i32, %arg1: i32) -> (i32, i32, i32) {
    %c0_i32 = arith.constant 0 : i32
    %c0_i32_0 = arith.constant 0 : i32
    %c0_i32_1 = arith.constant 0 : i32
    return %arg1, %c0_i32, %c0_i32_0 : i32, i32, i32
  }
  func.func @transform_3(%arg0: i32, %arg1: i32) -> (i32, i32) {
    %c0_i32 = arith.constant 0 : i32
    %c0_i32_0 = arith.constant 0 : i32
    %c0_i32_1 = arith.constant 0 : i32
    return %c0_i32, %c0_i32_0 : i32, i32
  }
  func.func @transform_4(%arg0: i32, %arg1: i32) -> (i32, i32) {
    %c0_i32 = arith.constant 0 : i32
    %c0_i32_0 = arith.constant 0 : i32
    %c0_i32_1 = arith.constant 0 : i32
    return %c0_i32, %c0_i32_0 : i32, i32
  }
  func.func @transform_5(%arg0: i32, %arg1: i32) -> i32 {
    %c0_i32 = arith.constant 0 : i32
    %c0_i32_0 = arith.constant 0 : i32
    return %c0_i32 : i32
  }
  func.func @transform_6(%arg0: i32, %arg1: i32) -> (i32, i32) {
    %c0_i32 = arith.constant 0 : i32
    %c0_i32_0 = arith.constant 0 : i32
    return %arg0, %c0_i32 : i32, i32
  }
  func.func @transform_7(%arg0: i32, %arg1: i32) -> (i32, i32) {
    %c0_i32 = arith.constant 0 : i32
    %c0_i32_0 = arith.constant 0 : i32
    return %arg0, %c0_i32 : i32, i32
  }
  func.func @transform_8(%arg0: i32, %arg1: i32) -> (i32, i32, i32) {
    %c0_i32 = arith.constant 0 : i32
    %c0_i32_0 = arith.constant 0 : i32
    return %arg1, %arg0, %c0_i32 : i32, i32, i32
  }
}

</mosaic_0001>

<llo_original>
// kernel: resnet_forward.1
$region0: #{resnet_forward.1}
  #allocation0 [shape = 'u32[]', space=smem, size = 0x4, offset = 0x4, fixed_abs, tag = 'smem constant byte address 0x4 - core index']
  #allocation1 [shape = 'u32[144,128]{1,0:T(1,128)}', space=vmem, size = 0x12000, scoped, tag = 'internal scratch']
  #allocation2 [shape = 'f32[8,256]{1,0:T(8,128)}', space=vmem, size = 0x2000, scoped, tag = 'scratch operand']
  #allocation3 [shape = 'f32[1]{0:T(128)S(6)}', space=smem, size = 0x200, scoped, tag = 'scoped memory for resnet_forward.1']
  %s0 = inlined_call_operand.vmem [shape: bf16[8,256], index: 0, kind: input, shape index: {}]
  %s1 = inlined_call_operand.vmem [shape: bf16[5,256,256], index: 1, kind: input, shape index: {}]
  %s2 = inlined_call_operand.vmem [shape: f32[5,1,256], index: 2, kind: input, shape index: {}]
  %s3 = inlined_call_operand.vmem [shape: bf16[256,128], index: 3, kind: input, shape index: {}]
  %s4 = inlined_call_operand.vmem [shape: f32[1,128], index: 4, kind: input, shape index: {}]
  %s5 = inlined_call_operand.<no memory space> [shape: f32[1], index: 5, kind: input, shape index: {}]
  %s6 = inlined_call_operand.hbm [shape: f32[8,128], index: 6, kind: output, shape index: {0}]
  %s7 = inlined_call_operand.hbm [shape: f32[8,128], index: 7, kind: output, shape index: {1}]
  %s8 = inlined_call_operand.hbm [shape: bf16[5,8,256], index: 8, kind: output, shape index: {2}]
  %9 = xla_tuple %s6, %s7, %s8
  %s10 = sld [smem:[#allocation0]]
  $region85: #{resnet_forward.1} parent=0
    _
  %s12 = ssub.s32 1, %s10
  %s13 = scalar_select 0, %s12, %s10
  %14 = sst [smem:[#allocation3]] %s5
  $region1: #{resnet_forward.1} parent=0
    #allocation4 [shape = 'u8[4096]{0}', space=vmem, size = 0x1000, scoped, tag = 'output window, operand 0, single buffered']
    #allocation5 [shape = 's32[2]{0}', space=sflag, size = 0x8, scoped, tag = 'scoped memory for resnet_forward.1']
    #allocation6 [shape = 'u8[4096]{0}', space=vmem, size = 0x1000, scoped, tag = 'output window, operand 1, single buffered']
    #allocation7 [shape = 's32[1]{0}', space=sflag, size = 0x4, scoped, tag = 'scoped memory for resnet_forward.1']
    #allocation8 [shape = 'u8[8192]{0}', space=vmem, size = 0x2000, scoped, tag = 'output window, operand 2']
    %15 = vsyncpa [#allocation5], 0
    %16 = vsyncpa [#allocation7], 0
    loop: start=0, step=1, limit=7
    $region2: #{resnet_forward.1} parent=1 // loop_pre_header
      _
    $region3: #{resnet_forward.1} parent=1 // loop_header
      %s18 = sphi 0, %s22
      %p19 = scmp.ge.s32.totalorder %s18, 7
      %s25 = sphi 0, %s37
      %s26 = sphi 0, %s33
      %s27 = sphi 0, %s25
      %s28 = sphi 0, %s26
      %s29 = sphi 0, %s27
      %s30 = sphi 0, %s28
      %s40 = sphi 0, %s42
      %s43 = sphi 0, %s40
      %s44 = sphi 0, %s43
      %s60 = sphi 0, %s44
      %s64 = sphi 0, %s64
      %s66 = sphi 0, %s64
      %s67 = sphi 0, %s66
      %s81 = sphi 0, %s67
      %s87 = sphi 0, %s89
      %s90 = sphi 0, %s87
      %s91 = sphi 0, %s90
      %s107 = sphi 0, %s91
      %s111 = sphi 0, %s111
      %s113 = sphi 0, %s111
      %s114 = sphi 0, %s113
      %s128 = sphi 0, %s114
      %s132 = sphi 0, %s132
      %s134 = sphi 0, %s132
      %s135 = sphi 0, %s134
      %s149 = sphi 0, %s135
      %s153 = sphi 0, %s153
      %s155 = sphi 0, %s153
      %s156 = sphi 0, %s155
      %s170 = sphi 0, %s156
      %s176 = sphi 0, %s178
      %s179 = sphi 0, %s176
      %s180 = sphi 0, %s179
      %s196 = sphi 0, %s180
      %s202 = sphi 0, %s204
      %s205 = sphi 0, %s202
      %s206 = sphi 0, %s205
      %s222 = sphi 0, %s206
      %s230 = sphi 0, %s232
      %s233 = sphi 0, %s230
      %s234 = sphi 0, %s233
      %s250 = sphi 0, %s234
    $region4: #{resnet_forward.1} parent=1 // loop_header_branch
      %21 = sbr.rel (%p19) target = $region8
    $region5: #{resnet_forward.1} parent=1 // loop_body
      %s23 = ssub.s32 %s18, 1
      %s24 = ssub.s32 %s18, 2
      %s31 = sadd.s32 1, %s26
      %p32 = scmp.ge.s32.totalorder %s31, 5
      %s33 = scalar_select %p32, 0, %s31
      %s34 = sadd.s32 1, %s25
      %s35 = scalar_select %p32, %s34, %s25
      %p36 = scmp.ge.s32.totalorder %s35, 1
      %s37 = scalar_select %p36, 0, %s35
      %s38 = ssub.s32 %s25, %s37
      %p39 = scmp.eq.s32.totalorder %s38, 0
      %s41 = sadd.s32 %s40, 1
      %s42 = scalar_select %p39, %s40, %s41
      %p45 = pneg %p39
      %p46 = scmp.eq.s32.totalorder %s18, 4
      %p47 = por %p45, %p46
      %p48 = scmp.ne.s32.totalorder %s40, %s43
      %p49 = scmp.eq.s32.totalorder %s18, 0
      %p50 = por %p48, %p49
      %p51 = scmp.ne.s32.totalorder %s40, %s43
      %p52 = scmp.eq.s32.totalorder %s23, 4
      %p53 = por %p51, %p52
      %p54 = scmp.ne.s32.totalorder %s43, %s44
      %p55 = scmp.eq.s32.totalorder %s23, 0
      %p56 = por %p54, %p55
      %p57 = scmp.ne.s32.totalorder %s43, %s44
      %p58 = scmp.eq.s32.totalorder %s24, 4
      %p59 = por %p57, %p58
      %p61 = scmp.ne.s32.totalorder %s44, %s60
      %p62 = scmp.eq.s32.totalorder %s24, 0
      %p63 = por %p61, %p62
      %s65 = sadd.s32 %s64, 1
      %p68 = scmp.eq.s32.totalorder %s18, 4
      %p69 = scmp.ne.s32.totalorder %s64, %s66
      %p70 = scmp.eq.s32.totalorder %s18, 0
      %p71 = por %p69, %p70
      %p72 = scmp.ne.s32.totalorder %s64, %s66
      %p73 = scmp.eq.s32.totalorder %s23, 4
      %p74 = por %p72, %p73
      %p75 = scmp.ne.s32.totalorder %s66, %s67
      %p76 = scmp.eq.s32.totalorder %s23, 0
      %p77 = por %p75, %p76
      %p78 = scmp.ne.s32.totalorder %s66, %s67
      %p79 = scmp.eq.s32.totalorder %s24, 4
      %p80 = por %p78, %p79
      %p82 = scmp.ne.s32.totalorder %s67, %s81
      %p83 = scmp.eq.s32.totalorder %s24, 0
      %p84 = por %p82, %p83
      %s85 = ssub.s32 %s26, %s33
      %p86 = scmp.eq.s32.totalorder %s85, 0
      %s88 = sadd.s32 %s87, 1
      %s89 = scalar_select %p86, %s87, %s88
      %p92 = pneg %p86
      %p93 = scmp.eq.s32.totalorder %s18, 4
      %p94 = por %p92, %p93
      %p95 = scmp.ne.s32.totalorder %s87, %s90
      %p96 = scmp.eq.s32.totalorder %s18, 0
      %p97 = por %p95, %p96
      %p98 = scmp.ne.s32.totalorder %s87, %s90
      %p99 = scmp.eq.s32.totalorder %s23, 4
      %p100 = por %p98, %p99
      %p101 = scmp.ne.s32.totalorder %s90, %s91
      %p102 = scmp.eq.s32.totalorder %s23, 0
      %p103 = por %p101, %p102
      %p104 = scmp.ne.s32.totalorder %s90, %s91
      %p105 = scmp.eq.s32.totalorder %s24, 4
      %p106 = por %p104, %p105
      %p108 = scmp.ne.s32.totalorder %s91, %s107
      %p109 = scmp.eq.s32.totalorder %s24, 0
      %p110 = por %p108, %p109
      %s112 = sadd.s32 %s111, 1
      %p115 = scmp.eq.s32.totalorder %s18, 4
      %p116 = scmp.ne.s32.totalorder %s111, %s113
      %p117 = scmp.eq.s32.totalorder %s18, 0
      %p118 = por %p116, %p117
      %p119 = scmp.ne.s32.totalorder %s111, %s113
      %p120 = scmp.eq.s32.totalorder %s23, 4
      %p121 = por %p119, %p120
      %p122 = scmp.ne.s32.totalorder %s113, %s114
      %p123 = scmp.eq.s32.totalorder %s23, 0
      %p124 = por %p122, %p123
      %p125 = scmp.ne.s32.totalorder %s113, %s114
      %p126 = scmp.eq.s32.totalorder %s24, 4
      %p127 = por %p125, %p126
      %p129 = scmp.ne.s32.totalorder %s114, %s128
      %p130 = scmp.eq.s32.totalorder %s24, 0
      %p131 = por %p129, %p130
      %s133 = sadd.s32 %s132, 1
      %p136 = scmp.eq.s32.totalorder %s18, 4
      %p137 = scmp.ne.s32.totalorder %s132, %s134
      %p138 = scmp.eq.s32.totalorder %s18, 0
      %p139 = por %p137, %p138
      %p140 = scmp.ne.s32.totalorder %s132, %s134
      %p141 = scmp.eq.s32.totalorder %s23, 4
      %p142 = por %p140, %p141
      %p143 = scmp.ne.s32.totalorder %s134, %s135
      %p144 = scmp.eq.s32.totalorder %s23, 0
      %p145 = por %p143, %p144
      %p146 = scmp.ne.s32.totalorder %s134, %s135
      %p147 = scmp.eq.s32.totalorder %s24, 4
      %p148 = por %p146, %p147
      %p150 = scmp.ne.s32.totalorder %s135, %s149
      %p151 = scmp.eq.s32.totalorder %s24, 0
      %p152 = por %p150, %p151
      %s154 = sadd.s32 %s153, 1
      %p157 = scmp.eq.s32.totalorder %s18, 4
      %p158 = scmp.ne.s32.totalorder %s153, %s155
      %p159 = scmp.eq.s32.totalorder %s18, 0
      %p160 = por %p158, %p159
      %p161 = scmp.ne.s32.totalorder %s153, %s155
      %p162 = scmp.eq.s32.totalorder %s23, 4
      %p163 = por %p161, %p162
      %p164 = scmp.ne.s32.totalorder %s155, %s156
      %p165 = scmp.eq.s32.totalorder %s23, 0
      %p166 = por %p164, %p165
      %p167 = scmp.ne.s32.totalorder %s155, %s156
      %p168 = scmp.eq.s32.totalorder %s24, 4
      %p169 = por %p167, %p168
      %p171 = scmp.ne.s32.totalorder %s156, %s170
      %p172 = scmp.eq.s32.totalorder %s24, 0
      %p173 = por %p171, %p172
      %s174 = ssub.s32 %s25, %s37
      %p175 = scmp.eq.s32.totalorder %s174, 0
      %s177 = sadd.s32 %s176, 1
      %s178 = scalar_select %p175, %s176, %s177
      %p181 = pneg %p175
      %p182 = scmp.eq.s32.totalorder %s18, 4
      %p183 = por %p181, %p182
      %p184 = scmp.ne.s32.totalorder %s176, %s179
      %p185 = scmp.eq.s32.totalorder %s18, 0
      %p186 = por %p184, %p185
      %p187 = scmp.ne.s32.totalorder %s176, %s179
      %p188 = scmp.eq.s32.totalorder %s23, 4
      %p189 = por %p187, %p188
      %p190 = scmp.ne.s32.totalorder %s179, %s180
      %p191 = scmp.eq.s32.totalorder %s23, 0
      %p192 = por %p190, %p191
      %p193 = scmp.ne.s32.totalorder %s179, %s180
      %p194 = scmp.eq.s32.totalorder %s24, 4
      %p195 = por %p193, %p194
      %p197 = scmp.ne.s32.totalorder %s180, %s196
      %p198 = scmp.eq.s32.totalorder %s24, 0
      %p199 = por %p197, %p198
      %s200 = ssub.s32 %s25, %s37
      %p201 = scmp.eq.s32.totalorder %s200, 0
      %s203 = sadd.s32 %s202, 1
      %s204 = scalar_select %p201, %s202, %s203
      %p207 = pneg %p201
      %p208 = scmp.eq.s32.totalorder %s18, 4
      %p209 = por %p207, %p208
      %p210 = scmp.ne.s32.totalorder %s202, %s205
      %p211 = scmp.eq.s32.totalorder %s18, 0
      %p212 = por %p210, %p211
      %p213 = scmp.ne.s32.totalorder %s202, %s205
      %p214 = scmp.eq.s32.totalorder %s23, 4
      %p215 = por %p213, %p214
      %p216 = scmp.ne.s32.totalorder %s205, %s206
      %p217 = scmp.eq.s32.totalorder %s23, 0
      %p218 = por %p216, %p217
      %p219 = scmp.ne.s32.totalorder %s205, %s206
      %p220 = scmp.eq.s32.totalorder %s24, 4
      %p221 = por %p219, %p220
      %p223 = scmp.ne.s32.totalorder %s206, %s222
      %p224 = scmp.eq.s32.totalorder %s24, 0
      %p225 = por %p223, %p224
      %s226 = ssub.s32 %s26, %s33
      %s227 = ssub.s32 %s25, %s37
      %s228 = sor.u32 %s226, %s227
      %p229 = scmp.eq.s32.totalorder %s228, 0
      %s231 = sadd.s32 %s230, 1
      %s232 = scalar_select %p229, %s230, %s231
      %p235 = pneg %p229
      %p236 = scmp.eq.s32.totalorder %s18, 4
      %p237 = por %p235, %p236
      %p238 = scmp.ne.s32.totalorder %s230, %s233
      %p239 = scmp.eq.s32.totalorder %s18, 0
      %p240 = por %p238, %p239
      %p241 = scmp.ne.s32.totalorder %s230, %s233
      %p242 = scmp.eq.s32.totalorder %s23, 4
      %p243 = por %p241, %p242
      %p244 = scmp.ne.s32.totalorder %s233, %s234
      %p245 = scmp.eq.s32.totalorder %s23, 0
      %p246 = por %p244, %p245
      %p247 = scmp.ne.s32.totalorder %s233, %s234
      %p248 = scmp.eq.s32.totalorder %s24, 4
      %p249 = por %p247, %p248
      %p251 = scmp.ne.s32.totalorder %s234, %s250
      %p252 = scmp.eq.s32.totalorder %s24, 0
      %p253 = por %p251, %p252
      %p254 = scmp.le.s32.totalorder 1, %s18
      %p255 = scmp.lt.s32.totalorder %s18, 6
      %p256 = pnand %p254, %p255
      %p257 = pneg %p256
      // Predicated region
      $region9: #{resnet_forward.1} parent=5 // pred_check
        _
      $region10: #{resnet_forward.1} parent=5 // pred_check_branch
        %259 = sbr.rel (%p256) target = $region12
      $region11: #{resnet_forward.1} parent=5 // pred_region
        %s260 = ssub.s32 %s18, 1
        // Predicated region
        $region13: #{resnet_forward.1} parent=11 // pred_check
          %p261 = pneg %p56
        $region14: #{resnet_forward.1} parent=11 // pred_check_branch
          %263 = sbr.rel (%p261) target = $region16
        $region15: #{resnet_forward.1} parent=11 // pred_region
          %p264 = scmp.lt.s32.totalorder %s27, 0
          %s265 = scalar_select %p264, %s27, 0
          %s266 = smul.addr %s265, 2
          %s267 = smul.addr %s266, 4
          %s268 = scalar_lea.vmem %s0, %s267
        $region16: #{resnet_forward.1} parent=11 // pred_fallthru
          _
        // Predicated region
        $region17: #{resnet_forward.1} parent=11 // pred_check
          %p269 = pneg %p77
        $region18: #{resnet_forward.1} parent=11 // pred_check_branch
          %271 = sbr.rel (%p269) target = $region20
        $region19: #{resnet_forward.1} parent=11 // pred_region
          _
        $region20: #{resnet_forward.1} parent=11 // pred_fallthru
          _
        // Predicated region
        $region21: #{resnet_forward.1} parent=11 // pred_check
          %p272 = pneg %p124
        $region22: #{resnet_forward.1} parent=11 // pred_check_branch
          %274 = sbr.rel (%p272) target = $region24
        $region23: #{resnet_forward.1} parent=11 // pred_region
          _
        $region24: #{resnet_forward.1} parent=11 // pred_fallthru
          _
        // Predicated region
        $region25: #{resnet_forward.1} parent=11 // pred_check
          %p275 = pneg %p145
        $region26: #{resnet_forward.1} parent=11 // pred_check_branch
          %277 = sbr.rel (%p275) target = $region28
        $region27: #{resnet_forward.1} parent=11 // pred_region
          _
        $region28: #{resnet_forward.1} parent=11 // pred_fallthru
          _
        // Predicated region
        $region29: #{resnet_forward.1} parent=11 // pred_check
          %p278 = pneg %p166
        $region30: #{resnet_forward.1} parent=11 // pred_check_branch
          %280 = sbr.rel (%p278) target = $region32
        $region31: #{resnet_forward.1} parent=11 // pred_region
          _
        $region32: #{resnet_forward.1} parent=11 // pred_fallthru
          _
      $region12: #{resnet_forward.1} parent=5 // pred_fallthru
        _
      %p281 = scmp.lt.s32.totalorder %s18, 5
      // Predicated region
      $region33: #{resnet_forward.1} parent=5 // pred_check
        %p282 = pneg %p281
      $region34: #{resnet_forward.1} parent=5 // pred_check_branch
        %284 = sbr.rel (%p282) target = $region36
      $region35: #{resnet_forward.1} parent=5 // pred_region
        // Predicated region
        $region37: #{resnet_forward.1} parent=35 // pred_check
          %p285 = pneg %p97
        $region38: #{resnet_forward.1} parent=35 // pred_check_branch
          %287 = sbr.rel (%p285) target = $region40
        $region39: #{resnet_forward.1} parent=35 // pred_region
          %p288 = scmp.lt.s32.totalorder %s26, 4
          %s289 = scalar_select %p288, %s26, 4
          %s290 = smul.addr %s289, 2
          %s291 = scalar_lea.vmem %s2, %s290
        $region40: #{resnet_forward.1} parent=35 // pred_fallthru
          _
      $region36: #{resnet_forward.1} parent=5 // pred_fallthru
        _
      %p292 = scmp.le.s32.totalorder 1, %s18
      %p293 = scmp.lt.s32.totalorder %s18, 6
      %p294 = pnand %p292, %p293
      %p295 = pneg %p294
      // Predicated region
      $region41: #{resnet_forward.1} parent=5 // pred_check
        _
      $region42: #{resnet_forward.1} parent=5 // pred_check_branch
        %297 = sbr.rel (%p294) target = $region44
      $region43: #{resnet_forward.1} parent=5 // pred_region
        %s298 = ssub.s32 %s18, 1
        %p299 = scmp.lt.s32.totalorder %s27, 0
        %s300 = scalar_select %p299, %s27, 0
        %s301 = smul.addr %s300, 2
        %s302 = smul.addr %s301, 4
        %s303 = scalar_lea.vmem %s0, %s302
        %p304 = pneg %p56
        %p305 = pneg %p53
        %p306 = pneg %p77
        %p307 = pneg %p74
        %p308 = scmp.lt.s32.totalorder %s28, 4
        %s309 = scalar_select %p308, %s28, 4
        %s310 = smul.addr %s309, 2
        %s311 = scalar_lea.vmem %s2, %s310
        %p312 = pneg %p103
        %p313 = pneg %p100
        %p314 = pneg %p124
        %p315 = pneg %p121
        %p316 = pneg %p145
        %p317 = pneg %p142
        %p318 = pneg %p166
        %p319 = pneg %p163
        %p320 = pneg %p192
        %p321 = pneg %p189
        %p322 = pneg %p218
        %p323 = pneg %p215
        %p324 = pneg %p246
        %p325 = pneg %p243
        %s326 = sand.u32 %s23, 1
        %s327 = scalar_lea.sflag [#allocation5], %s326
        %s328 = sand.u32 %s233, 1
        %s329 = smul.addr %s328, 8
        %s330 = scalar_lea.vmem [#allocation8], %s329
        %p331 = scmp.lt.s32.totalorder %s27, 0
        %s332 = scalar_select %p331, %s27, 0
        %s333 = smul.addr %s332, 2
        %s334 = smul.addr %s333, 4
        %s335 = scalar_lea.vmem %s0, %s334
        %p336 = scmp.lt.s32.totalorder %s28, 4
        %s337 = scalar_select %p336, %s28, 4
        %s338 = smul.addr %s337, 2
        %s339 = scalar_lea.vmem %s2, %s338
        %s341 = sld [smem:[#allocation3]]
        %s342 = smul.u32 %s28, 64
        %s343 = smul.addr %s342, 4
        %s344 = scalar_lea.vmem %s1, %s343
        %v345 = vld [vmem:[%s344] sm:$0xff]
        %v346 = vld [vmem:[%s344 + $0x8] sm:$0xff]
        %v347 = vld [vmem:[%s344 + $0x10] sm:$0xff]
        %v348 = vld [vmem:[%s344 + $0x18] sm:$0xff]
        %v349 = vld [vmem:[%s344 + $0x20] sm:$0xff]
        %v350 = vld [vmem:[%s344 + $0x28] sm:$0xff]
        %v351 = vld [vmem:[%s344 + $0x30] sm:$0xff]
        %v352 = vld [vmem:[%s344 + $0x38] sm:$0xff]
        %v353 = vld [vmem:[%s344 + $0x40] sm:$0xff]
        %v354 = vld [vmem:[%s344 + $0x48] sm:$0xff]
        %v355 = vld [vmem:[%s344 + $0x50] sm:$0xff]
        %v356 = vld [vmem:[%s344 + $0x58] sm:$0xff]
        %v357 = vld [vmem:[%s344 + $0x60] sm:$0xff]
        %v358 = vld [vmem:[%s344 + $0x68] sm:$0xff]
        %v359 = vld [vmem:[%s344 + $0x70] sm:$0xff]
        %v360 = vld [vmem:[%s344 + $0x78] sm:$0xff]
        %v361 = vld [vmem:[%s344 + $0x80] sm:$0xff]
        %v362 = vld [vmem:[%s344 + $0x88] sm:$0xff]
        %v363 = vld [vmem:[%s344 + $0x90] sm:$0xff]
        %v364 = vld [vmem:[%s344 + $0x98] sm:$0xff]
        %v365 = vld [vmem:[%s344 + $0xa0] sm:$0xff]
        %v366 = vld [vmem:[%s344 + $0xa8] sm:$0xff]
        %v367 = vld [vmem:[%s344 + $0xb0] sm:$0xff]
        %v368 = vld [vmem:[%s344 + $0xb8] sm:$0xff]
        %v369 = vld [vmem:[%s344 + $0xc0] sm:$0xff]
        %v370 = vld [vmem:[%s344 + $0xc8] sm:$0xff]
        %v371 = vld [vmem:[%s344 + $0xd0] sm:$0xff]
        %v372 = vld [vmem:[%s344 + $0xd8] sm:$0xff]
        %v373 = vld [vmem:[%s344 + $0xe0] sm:$0xff]
        %v374 = vld [vmem:[%s344 + $0xe8] sm:$0xff]
        %v375 = vld [vmem:[%s344 + $0xf0] sm:$0xff]
        %v376 = vld [vmem:[%s344 + $0xf8] sm:$0xff]
        %p377 = scmp.eq.s32.totalorder %s28, 0
        // Predicated region
        $region45: #{resnet_forward.1} parent=43 // pred_check
          %p378 = pneg %p377
        $region46: #{resnet_forward.1} parent=43 // pred_check_branch
          %380 = sbr.rel (%p378) target = $region48
        $region47: #{resnet_forward.1} parent=43 // pred_region
          %v381 = vld [vmem:[%s335] sm:$0xff]
          %v383 = vunpack.c.l.b16 %v381
          %v384 = vunpack.c.h.b16 %v381
          %v385 = vpack.c.b16 %v383, %v383
          %v386 = vpack.c.b16 %v384, %v384
          %v421 = vunpack.c.l.b16 %v345
          %v422 = vunpack.c.h.b16 %v345
          %v423 = vunpack.c.l.b16 %v346
          %v424 = vunpack.c.h.b16 %v346
          %v425 = vunpack.c.l.b16 %v347
          %v426 = vunpack.c.h.b16 %v347
          %v427 = vunpack.c.l.b16 %v348
          %v428 = vunpack.c.h.b16 %v348
          %v429 = vunpack.c.l.b16 %v349
          %v430 = vunpack.c.h.b16 %v349
          %v431 = vunpack.c.l.b16 %v350
          %v432 = vunpack.c.h.b16 %v350
          %v433 = vunpack.c.l.b16 %v351
          %v434 = vunpack.c.h.b16 %v351
          %v435 = vunpack.c.l.b16 %v352
          %v436 = vunpack.c.h.b16 %v352
          %v437 = vunpack.c.l.b16 %v353
          %v438 = vunpack.c.h.b16 %v353
          %v439 = vunpack.c.l.b16 %v354
          %v440 = vunpack.c.h.b16 %v354
          %v441 = vunpack.c.l.b16 %v355
          %v442 = vunpack.c.h.b16 %v355
          %v443 = vunpack.c.l.b16 %v356
          %v444 = vunpack.c.h.b16 %v356
          %v445 = vunpack.c.l.b16 %v357
          %v446 = vunpack.c.h.b16 %v357
          %v447 = vunpack.c.l.b16 %v358
          %v448 = vunpack.c.h.b16 %v358
          %v449 = vunpack.c.l.b16 %v359
          %v450 = vunpack.c.h.b16 %v359
          %v451 = vunpack.c.l.b16 %v360
          %v452 = vunpack.c.h.b16 %v360
          %v453 = vunpack.c.l.b16 %v361
          %v454 = vunpack.c.h.b16 %v361
          %v455 = vunpack.c.l.b16 %v362
          %v456 = vunpack.c.h.b16 %v362
          %v457 = vunpack.c.l.b16 %v363
          %v458 = vunpack.c.h.b16 %v363
          %v459 = vunpack.c.l.b16 %v364
          %v460 = vunpack.c.h.b16 %v364
          %v461 = vunpack.c.l.b16 %v365
          %v462 = vunpack.c.h.b16 %v365
          %v463 = vunpack.c.l.b16 %v366
          %v464 = vunpack.c.h.b16 %v366
          %v465 = vunpack.c.l.b16 %v367
          %v466 = vunpack.c.h.b16 %v367
          %v467 = vunpack.c.l.b16 %v368
          %v468 = vunpack.c.h.b16 %v368
          %v469 = vunpack.c.l.b16 %v369
          %v470 = vunpack.c.h.b16 %v369
          %v471 = vunpack.c.l.b16 %v370
          %v472 = vunpack.c.h.b16 %v370
          %v473 = vunpack.c.l.b16 %v371
          %v474 = vunpack.c.h.b16 %v371
          %v475 = vunpack.c.l.b16 %v372
          %v476 = vunpack.c.h.b16 %v372
          %v477 = vunpack.c.l.b16 %v373
          %v478 = vunpack.c.h.b16 %v373
          %v479 = vunpack.c.l.b16 %v374
          %v480 = vunpack.c.h.b16 %v374
          %v481 = vunpack.c.l.b16 %v375
          %v482 = vunpack.c.h.b16 %v375
          %v483 = vunpack.c.l.b16 %v376
          %v484 = vunpack.c.h.b16 %v376
          %v485 = vpack.c.b16 %v423, %v421
          %v486 = vpack.c.b16 %v424, %v422
          %v487 = vpack.c.b16 %v427, %v425
          %v488 = vpack.c.b16 %v428, %v426
          %v489 = vpack.c.b16 %v431, %v429
          %v490 = vpack.c.b16 %v432, %v430
          %v491 = vpack.c.b16 %v435, %v433
          %v492 = vpack.c.b16 %v436, %v434
          %v493 = vpack.c.b16 %v439, %v437
          %v494 = vpack.c.b16 %v440, %v438
          %v495 = vpack.c.b16 %v443, %v441
          %v496 = vpack.c.b16 %v444, %v442
          %v497 = vpack.c.b16 %v447, %v445
          %v498 = vpack.c.b16 %v448, %v446
          %v499 = vpack.c.b16 %v451, %v449
          %v500 = vpack.c.b16 %v452, %v450
          %v501 = vpack.c.b16 %v455, %v453
          %v502 = vpack.c.b16 %v456, %v454
          %v503 = vpack.c.b16 %v459, %v457
          %v504 = vpack.c.b16 %v460, %v458
          %v505 = vpack.c.b16 %v463, %v461
          %v506 = vpack.c.b16 %v464, %v462
          %v507 = vpack.c.b16 %v467, %v465
          %v508 = vpack.c.b16 %v468, %v466
          %v509 = vpack.c.b16 %v471, %v469
          %v510 = vpack.c.b16 %v472, %v470
          %v511 = vpack.c.b16 %v475, %v473
          %v512 = vpack.c.b16 %v476, %v474
          %v513 = vpack.c.b16 %v479, %v477
          %v514 = vpack.c.b16 %v480, %v478
          %v515 = vpack.c.b16 %v483, %v481
          %v516 = vpack.c.b16 %v484, %v482
          %549 = vmatprep.subr.bf16.mxu0 %v486
          %550 = vmatpush1.bf16.msra.mxu0 %v485
          %551 = vmatprep.subr.bf16.mxu0 %v488
          %552 = vmatpush1.bf16.msra.mxu0 %v487
          %553 = vmatprep.subr.bf16.mxu0 %v490
          %554 = vmatpush1.bf16.msra.mxu0 %v489
          %555 = vmatprep.subr.bf16.mxu0 %v492
          %556 = vmatpush1.bf16.msra.mxu0 %v491
          %557 = vmatprep.subr.bf16.mxu0 %v494
          %558 = vmatpush1.bf16.msra.mxu0 %v493
          %559 = vmatprep.subr.bf16.mxu0 %v496
          %560 = vmatpush1.bf16.msra.mxu0 %v495
          %561 = vmatprep.subr.bf16.mxu0 %v498
          %562 = vmatpush1.bf16.msra.mxu0 %v497
          %563 = vmatprep.subr.bf16.mxu0 %v500
          %564 = vmatpush1.bf16.msra.mxu0 %v499
          %565 = vmatprep.subr.bf16.mxu0 %v502
          %566 = vmatpush1.bf16.msra.mxu0 %v501
          %567 = vmatprep.subr.bf16.mxu0 %v504
          %568 = vmatpush1.bf16.msra.mxu0 %v503
          %569 = vmatprep.subr.bf16.mxu0 %v506
          %570 = vmatpush1.bf16.msra.mxu0 %v505
          %571 = vmatprep.subr.bf16.mxu0 %v508
          %572 = vmatpush1.bf16.msra.mxu0 %v507
          %573 = vmatprep.subr.bf16.mxu0 %v510
          %574 = vmatpush1.bf16.msra.mxu0 %v509
          %575 = vmatprep.subr.bf16.mxu0 %v512
          %576 = vmatpush1.bf16.msra.mxu0 %v511
          %577 = vmatprep.subr.bf16.mxu0 %v514
          %578 = vmatpush1.bf16.msra.mxu0 %v513
          %579 = vmatprep.subr.bf16.mxu0 %v516
          %580 = vmatpush1.bf16.msra.mxu0 %v515
          %581 = vmatprep.mubr.bf16.mxu0 %v386
          %582 = vmatmul.mubr.bf16.gmra.mrb[0].mxu0 %v385
          %v583 = vpop.f32.mrb[0].mxu0
          %v584 = vadd.f32 0.0, %v583
          %v585 = vpop.f32.mrb[0].mxu0
          %v586 = vadd.f32 0.0, %v585
          %v587 = vpop.f32.mrb[0].mxu0
          %v588 = vpop.f32.mrb[0].mxu0
          %589 = vdwg.mxu0
          %590 = vst [vmem:[#allocation2] sm:$0xff] %v584
          %591 = vst [vmem:[#allocation2 + $0x8] sm:$0xff] %v586
        $region48: #{resnet_forward.1} parent=43 // pred_fallthru
          _
        %p592 = scmp.gt.s32.totalorder %s28, 0
        // Predicated region
        $region49: #{resnet_forward.1} parent=43 // pred_check
          %p593 = pneg %p592
        $region50: #{resnet_forward.1} parent=43 // pred_check_branch
          %595 = sbr.rel (%p593) target = $region52
        $region51: #{resnet_forward.1} parent=43 // pred_region
          %v596 = vld [vmem:[#allocation2] sm:$0xff]
          %v597 = vld [vmem:[#allocation2 + $0x8] sm:$0xff]
          %v598 = vpack.c.bf16 %v596, %v596
          %v599 = vpack.c.bf16 %v597, %v597
          %v600 = vld [vmem:[%s339] sm:$0x3]
          %v602 = vlaneseq
          %v603 = vshrl.u32 %v602, 7
          %v604 = vsub.s32 0, %v603
          %v605 = vrot.slane %v600, %v604
          %v606 = vlaneseq
          %v607 = vshrl.u32 %v606, 7
          %v608 = vsub.s32 1, %v607
          %v609 = vrot.slane %v600, %v608
          %v644 = vunpack.c.l.b16 %v345
          %v645 = vunpack.c.h.b16 %v345
          %v646 = vunpack.c.l.b16 %v346
          %v647 = vunpack.c.h.b16 %v346
          %v648 = vunpack.c.l.b16 %v347
          %v649 = vunpack.c.h.b16 %v347
          %v650 = vunpack.c.l.b16 %v348
          %v651 = vunpack.c.h.b16 %v348
          %v652 = vunpack.c.l.b16 %v349
          %v653 = vunpack.c.h.b16 %v349
          %v654 = vunpack.c.l.b16 %v350
          %v655 = vunpack.c.h.b16 %v350
          %v656 = vunpack.c.l.b16 %v351
          %v657 = vunpack.c.h.b16 %v351
          %v658 = vunpack.c.l.b16 %v352
          %v659 = vunpack.c.h.b16 %v352
          %v660 = vunpack.c.l.b16 %v353
          %v661 = vunpack.c.h.b16 %v353
          %v662 = vunpack.c.l.b16 %v354
          %v663 = vunpack.c.h.b16 %v354
          %v664 = vunpack.c.l.b16 %v355
          %v665 = vunpack.c.h.b16 %v355
          %v666 = vunpack.c.l.b16 %v356
          %v667 = vunpack.c.h.b16 %v356
          %v668 = vunpack.c.l.b16 %v357
          %v669 = vunpack.c.h.b16 %v357
          %v670 = vunpack.c.l.b16 %v358
          %v671 = vunpack.c.h.b16 %v358
          %v672 = vunpack.c.l.b16 %v359
          %v673 = vunpack.c.h.b16 %v359
          %v674 = vunpack.c.l.b16 %v360
          %v675 = vunpack.c.h.b16 %v360
          %v676 = vunpack.c.l.b16 %v361
          %v677 = vunpack.c.h.b16 %v361
          %v678 = vunpack.c.l.b16 %v362
          %v679 = vunpack.c.h.b16 %v362
          %v680 = vunpack.c.l.b16 %v363
          %v681 = vunpack.c.h.b16 %v363
          %v682 = vunpack.c.l.b16 %v364
          %v683 = vunpack.c.h.b16 %v364
          %v684 = vunpack.c.l.b16 %v365
          %v685 = vunpack.c.h.b16 %v365
          %v686 = vunpack.c.l.b16 %v366
          %v687 = vunpack.c.h.b16 %v366
          %v688 = vunpack.c.l.b16 %v367
          %v689 = vunpack.c.h.b16 %v367
          %v690 = vunpack.c.l.b16 %v368
          %v691 = vunpack.c.h.b16 %v368
          %v692 = vunpack.c.l.b16 %v369
          %v693 = vunpack.c.h.b16 %v369
          %v694 = vunpack.c.l.b16 %v370
          %v695 = vunpack.c.h.b16 %v370
          %v696 = vunpack.c.l.b16 %v371
          %v697 = vunpack.c.h.b16 %v371
          %v698 = vunpack.c.l.b16 %v372
          %v699 = vunpack.c.h.b16 %v372
          %v700 = vunpack.c.l.b16 %v373
          %v701 = vunpack.c.h.b16 %v373
          %v702 = vunpack.c.l.b16 %v374
          %v703 = vunpack.c.h.b16 %v374
          %v704 = vunpack.c.l.b16 %v375
          %v705 = vunpack.c.h.b16 %v375
          %v706 = vunpack.c.l.b16 %v376
          %v707 = vunpack.c.h.b16 %v376
          %v708 = vpack.c.b16 %v646, %v644
          %v709 = vpack.c.b16 %v647, %v645
          %v710 = vpack.c.b16 %v650, %v648
          %v711 = vpack.c.b16 %v651, %v649
          %v712 = vpack.c.b16 %v654, %v652
          %v713 = vpack.c.b16 %v655, %v653
          %v714 = vpack.c.b16 %v658, %v656
          %v715 = vpack.c.b16 %v659, %v657
          %v716 = vpack.c.b16 %v662, %v660
          %v717 = vpack.c.b16 %v663, %v661
          %v718 = vpack.c.b16 %v666, %v664
          %v719 = vpack.c.b16 %v667, %v665
          %v720 = vpack.c.b16 %v670, %v668
          %v721 = vpack.c.b16 %v671, %v669
          %v722 = vpack.c.b16 %v674, %v672
          %v723 = vpack.c.b16 %v675, %v673
          %v724 = vpack.c.b16 %v678, %v676
          %v725 = vpack.c.b16 %v679, %v677
          %v726 = vpack.c.b16 %v682, %v680
          %v727 = vpack.c.b16 %v683, %v681
          %v728 = vpack.c.b16 %v686, %v684
          %v729 = vpack.c.b16 %v687, %v685
          %v730 = vpack.c.b16 %v690, %v688
          %v731 = vpack.c.b16 %v691, %v689
          %v732 = vpack.c.b16 %v694, %v692
          %v733 = vpack.c.b16 %v695, %v693
          %v734 = vpack.c.b16 %v698, %v696
          %v735 = vpack.c.b16 %v699, %v697
          %v736 = vpack.c.b16 %v702, %v700
          %v737 = vpack.c.b16 %v703, %v701
          %v738 = vpack.c.b16 %v706, %v704
          %v739 = vpack.c.b16 %v707, %v705
          %772 = vmatprep.subr.bf16.mxu0 %v709
          %773 = vmatpush1.bf16.msra.mxu0 %v708
          %774 = vmatprep.subr.bf16.mxu0 %v711
          %775 = vmatpush1.bf16.msra.mxu0 %v710
          %776 = vmatprep.subr.bf16.mxu0 %v713
          %777 = vmatpush1.bf16.msra.mxu0 %v712
          %778 = vmatprep.subr.bf16.mxu0 %v715
          %779 = vmatpush1.bf16.msra.mxu0 %v714
          %780 = vmatprep.subr.bf16.mxu0 %v717
          %781 = vmatpush1.bf16.msra.mxu0 %v716
          %782 = vmatprep.subr.bf16.mxu0 %v719
          %783 = vmatpush1.bf16.msra.mxu0 %v718
          %784 = vmatprep.subr.bf16.mxu0 %v721
          %785 = vmatpush1.bf16.msra.mxu0 %v720
          %786 = vmatprep.subr.bf16.mxu0 %v723
          %787 = vmatpush1.bf16.msra.mxu0 %v722
          %788 = vmatprep.subr.bf16.mxu0 %v725
          %789 = vmatpush1.bf16.msra.mxu0 %v724
          %790 = vmatprep.subr.bf16.mxu0 %v727
          %791 = vmatpush1.bf16.msra.mxu0 %v726
          %792 = vmatprep.subr.bf16.mxu0 %v729
          %793 = vmatpush1.bf16.msra.mxu0 %v728
          %794 = vmatprep.subr.bf16.mxu0 %v731
          %795 = vmatpush1.bf16.msra.mxu0 %v730
          %796 = vmatprep.subr.bf16.mxu0 %v733
          %797 = vmatpush1.bf16.msra.mxu0 %v732
          %798 = vmatprep.subr.bf16.mxu0 %v735
          %799 = vmatpush1.bf16.msra.mxu0 %v734
          %800 = vmatprep.subr.bf16.mxu0 %v737
          %801 = vmatpush1.bf16.msra.mxu0 %v736
          %802 = vmatprep.subr.bf16.mxu0 %v739
          %803 = vmatpush1.bf16.msra.mxu0 %v738
          %804 = vmatprep.mubr.bf16.mxu0 %v599
          %805 = vmatmul.mubr.bf16.gmra.mrb[0].mxu0 %v598
          %v806 = vpop.f32.mrb[0].mxu0
          %v807 = vadd.f32 %v605, %v806
          %v808 = vpop.f32.mrb[0].mxu0
          %v809 = vadd.f32 %v609, %v808
          %v810 = vpop.f32.mrb[0].mxu0
          %v811 = vpop.f32.mrb[0].mxu0
          %812 = vdwg.mxu0
          %v813 = vmax.f32 %v807, 0.0
          %v814 = vmax.f32 %v809, 0.0
          %v815 = vstv %s341
          %v816 = vmul.f32 %v815, %v813
          %v817 = vmul.f32 %v815, %v814
          %v818 = vadd.f32 %v596, %v816
          %v819 = vadd.f32 %v597, %v817
          %820 = vst [vmem:[#allocation2] sm:$0xff] %v818
          %821 = vst [vmem:[#allocation2 + $0x8] sm:$0xff] %v819
        $region52: #{resnet_forward.1} parent=43 // pred_fallthru
          _
        %v822 = vld [vmem:[#allocation2] sm:$0xff]
        %v823 = vld [vmem:[#allocation2 + $0x8] sm:$0xff]
        %v824 = vpack.c.bf16 %v822, %v822
        %v825 = vpack.c.bf16 %v823, %v823
        %v828 = vunpack.c.l.b16 %v824
        %v829 = vunpack.c.l.b16 %v825
        %v830 = vpack.c.b16 %v829, %v828
        %832 = vst [vmem:[%s330] sm:$0xff] %v830
        %p833 = scmp.eq.s32.totalorder %s28, 4
        // Predicated region
        $region53: #{resnet_forward.1} parent=43 // pred_check
          %p834 = pneg %p833
        $region54: #{resnet_forward.1} parent=43 // pred_check_branch
          %836 = sbr.rel (%p834) target = $region56
        $region55: #{resnet_forward.1} parent=43 // pred_region
          %v837 = vld [vmem:[#allocation2] sm:$0xff]
          %v838 = vld [vmem:[#allocation2 + $0x8] sm:$0xff]
          %v839 = vpack.c.bf16 %v837, %v837
          %v840 = vpack.c.bf16 %v838, %v838
          %v841 = vld [vmem:[%s3] sm:$0xf]
          %v842 = vld [vmem:[%s3 + $0x4] sm:$0xf]
          %v843 = vld [vmem:[%s3 + $0x8] sm:$0xf]
          %v844 = vld [vmem:[%s3 + $0xc] sm:$0xf]
          %v845 = vld [vmem:[%s3 + $0x10] sm:$0xf]
          %v846 = vld [vmem:[%s3 + $0x14] sm:$0xf]
          %v847 = vld [vmem:[%s3 + $0x18] sm:$0xf]
          %v848 = vld [vmem:[%s3 + $0x1c] sm:$0xf]
          %v849 = vld [vmem:[%s3 + $0x20] sm:$0xf]
          %v850 = vld [vmem:[%s3 + $0x24] sm:$0xf]
          %v851 = vld [vmem:[%s3 + $0x28] sm:$0xf]
          %v852 = vld [vmem:[%s3 + $0x2c] sm:$0xf]
          %v853 = vld [vmem:[%s3 + $0x30] sm:$0xf]
          %v854 = vld [vmem:[%s3 + $0x34] sm:$0xf]
          %v855 = vld [vmem:[%s3 + $0x38] sm:$0xf]
          %v856 = vld [vmem:[%s3 + $0x3c] sm:$0xf]
          %v857 = vld [vmem:[%s3 + $0x40] sm:$0xf]
          %v858 = vld [vmem:[%s3 + $0x44] sm:$0xf]
          %v859 = vld [vmem:[%s3 + $0x48] sm:$0xf]
          %v860 = vld [vmem:[%s3 + $0x4c] sm:$0xf]
          %v861 = vld [vmem:[%s3 + $0x50] sm:$0xf]
          %v862 = vld [vmem:[%s3 + $0x54] sm:$0xf]
          %v863 = vld [vmem:[%s3 + $0x58] sm:$0xf]
          %v864 = vld [vmem:[%s3 + $0x5c] sm:$0xf]
          %v865 = vld [vmem:[%s3 + $0x60] sm:$0xf]
          %v866 = vld [vmem:[%s3 + $0x64] sm:$0xf]
          %v867 = vld [vmem:[%s3 + $0x68] sm:$0xf]
          %v868 = vld [vmem:[%s3 + $0x6c] sm:$0xf]
          %v869 = vld [vmem:[%s3 + $0x70] sm:$0xf]
          %v870 = vld [vmem:[%s3 + $0x74] sm:$0xf]
          %v871 = vld [vmem:[%s3 + $0x78] sm:$0xf]
          %v872 = vld [vmem:[%s3 + $0x7c] sm:$0xf]
          %v873 = vld [vmem:[%s4] sm:$0x1]
          %v875 = vlaneseq
          %v876 = vshrl.u32 %v875, 7
          %v877 = vsub.s32 0, %v876
          %v878 = vrot.slane %v873, %v877
          %v912 = vunpack.c.l.b16 %v841
          %v913 = vunpack.c.l.b16 %v842
          %v914 = vunpack.c.l.b16 %v843
          %v915 = vunpack.c.l.b16 %v844
          %v916 = vunpack.c.l.b16 %v845
          %v917 = vunpack.c.l.b16 %v846
          %v918 = vunpack.c.l.b16 %v847
          %v919 = vunpack.c.l.b16 %v848
          %v920 = vunpack.c.l.b16 %v849
          %v921 = vunpack.c.l.b16 %v850
          %v922 = vunpack.c.l.b16 %v851
          %v923 = vunpack.c.l.b16 %v852
          %v924 = vunpack.c.l.b16 %v853
          %v925 = vunpack.c.l.b16 %v854
          %v926 = vunpack.c.l.b16 %v855
          %v927 = vunpack.c.l.b16 %v856
          %v928 = vunpack.c.l.b16 %v857
          %v929 = vunpack.c.l.b16 %v858
          %v930 = vunpack.c.l.b16 %v859
          %v931 = vunpack.c.l.b16 %v860
          %v932 = vunpack.c.l.b16 %v861
          %v933 = vunpack.c.l.b16 %v862
          %v934 = vunpack.c.l.b16 %v863
          %v935 = vunpack.c.l.b16 %v864
          %v936 = vunpack.c.l.b16 %v865
          %v937 = vunpack.c.l.b16 %v866
          %v938 = vunpack.c.l.b16 %v867
          %v939 = vunpack.c.l.b16 %v868
          %v940 = vunpack.c.l.b16 %v869
          %v941 = vunpack.c.l.b16 %v870
          %v942 = vunpack.c.l.b16 %v871
          %v943 = vunpack.c.l.b16 %v872
          %v944 = vpack.c.b16 %v913, %v912
          %v945 = vpack.c.b16 %v915, %v914
          %v946 = vpack.c.b16 %v917, %v916
          %v947 = vpack.c.b16 %v919, %v918
          %v948 = vpack.c.b16 %v921, %v920
          %v949 = vpack.c.b16 %v923, %v922
          %v950 = vpack.c.b16 %v925, %v924
          %v951 = vpack.c.b16 %v927, %v926
          %v952 = vpack.c.b16 %v929, %v928
          %v953 = vpack.c.b16 %v931, %v930
          %v954 = vpack.c.b16 %v933, %v932
          %v955 = vpack.c.b16 %v935, %v934
          %v956 = vpack.c.b16 %v937, %v936
          %v957 = vpack.c.b16 %v939, %v938
          %v958 = vpack.c.b16 %v941, %v940
          %v959 = vpack.c.b16 %v943, %v942
          %976 = vmatprep.subr.bf16.mxu0 0
          %977 = vmatpush1.bf16.msra.mxu0 %v944
          %978 = vmatprep.subr.bf16.mxu0 0
          %979 = vmatpush1.bf16.msra.mxu0 %v945
          %980 = vmatprep.subr.bf16.mxu0 0
          %981 = vmatpush1.bf16.msra.mxu0 %v946
          %982 = vmatprep.subr.bf16.mxu0 0
          %983 = vmatpush1.bf16.msra.mxu0 %v947
          %984 = vmatprep.subr.bf16.mxu0 0
          %985 = vmatpush1.bf16.msra.mxu0 %v948
          %986 = vmatprep.subr.bf16.mxu0 0
          %987 = vmatpush1.bf16.msra.mxu0 %v949
          %988 = vmatprep.subr.bf16.mxu0 0
          %989 = vmatpush1.bf16.msra.mxu0 %v950
          %990 = vmatprep.subr.bf16.mxu0 0
          %991 = vmatpush1.bf16.msra.mxu0 %v951
          %992 = vmatprep.subr.bf16.mxu0 0
          %993 = vmatpush1.bf16.msra.mxu0 %v952
          %994 = vmatprep.subr.bf16.mxu0 0
          %995 = vmatpush1.bf16.msra.mxu0 %v953
          %996 = vmatprep.subr.bf16.mxu0 0
          %997 = vmatpush1.bf16.msra.mxu0 %v954
          %998 = vmatprep.subr.bf16.mxu0 0
          %999 = vmatpush1.bf16.msra.mxu0 %v955
          %1000 = vmatprep.subr.bf16.mxu0 0
          %1001 = vmatpush1.bf16.msra.mxu0 %v956
          %1002 = vmatprep.subr.bf16.mxu0 0
          %1003 = vmatpush1.bf16.msra.mxu0 %v957
          %1004 = vmatprep.subr.bf16.mxu0 0
          %1005 = vmatpush1.bf16.msra.mxu0 %v958
          %1006 = vmatprep.subr.bf16.mxu0 0
          %1007 = vmatpush1.bf16.msra.mxu0 %v959
          %1008 = vmatprep.mubr.bf16.mxu0 %v840
          %1009 = vmatmul.mubr.bf16.gmra.mrb[0].mxu0 %v839
          %v1010 = vpop.f32.mrb[0].mxu0
          %v1011 = vadd.f32 %v878, %v1010
          %v1012 = vpop.f32.mrb[0].mxu0
          %v1013 = vpop.f32.mrb[0].mxu0
          %v1014 = vpop.f32.mrb[0].mxu0
          %1015 = vdwg.mxu0
          %1016 = vst [vmem:[#allocation6] sm:$0xff] %v1011
          %v1017 = vlaneseq
          %v1018 = vand.u32 %v1017, 127
          %vm1019 = vcmp.lt.s32.totalorder %v1018, 10
          %v1020 = vsel %vm1019, %v1011, -3.4028235e+38
          %1021 = vmax.xlane.f32.xlu0 %v1020
          %v1022 = vpop.xlane.xlu0 %1021
          %v1023 = vsub.f32 %v1020, %v1022
          %v1024 = vmul.f32 %v1023, 1.442695
          %v1025 = vpow.pop %v1024
          %1026 = vadd.xlane.f32.xlu0 %v1025
          %v1027 = vpop.xlane.xlu0 %1026
          %v1028 = vrcp.pop %v1027
          %v1029 = vmul.f32 %v1025, %v1028
          %1030 = vst [vmem:[#allocation4] sm:$0xff] %v1029
        $region56: #{resnet_forward.1} parent=43 // pred_fallthru
          _
        %s1031 = sand.u32 %s23, 1
        %s1032 = scalar_lea.sflag [#allocation5], %s1031
        %s1033 = sand.u32 %s233, 1
        %s1034 = smul.addr %s1033, 8
        %s1035 = scalar_lea.vmem [#allocation8], %s1034
        // Predicated region
        $region57: #{resnet_forward.1} parent=43 // pred_check
          %p1036 = pneg %p189
        $region58: #{resnet_forward.1} parent=43 // pred_check_branch
          %1038 = sbr.rel (%p1036) target = $region60
        $region59: #{resnet_forward.1} parent=43 // pred_region
          %s1040 = ssub.s32 128, 128
          %1041 = vsyncadd [#allocation5], %s1040
          %s1042 = smul.addr %s27, 128
          %s1043 = scalar_lea.hbm %s6, %s1042
          %s1045 = sshll.u32 [#allocation4], 4
          %s1046 = int_to_ptr.vmem [resolvable:$true] %s1045
          %1048 = dma.vmem_to_hbm [thread:$0]  %s1046, 128, %s1043, [#allocation5]
        $region60: #{resnet_forward.1} parent=43 // pred_fallthru
          _
        // Predicated region
        $region61: #{resnet_forward.1} parent=43 // pred_check
          %p1049 = pneg %p215
        $region62: #{resnet_forward.1} parent=43 // pred_check_branch
          %1051 = sbr.rel (%p1049) target = $region64
        $region63: #{resnet_forward.1} parent=43 // pred_region
          %s1053 = ssub.s32 128, 128
          %1054 = vsyncadd [#allocation7], %s1053
          %s1055 = smul.addr %s27, 128
          %s1056 = scalar_lea.hbm %s7, %s1055
          %s1058 = sshll.u32 [#allocation6], 4
          %s1059 = int_to_ptr.vmem [resolvable:$true] %s1058
          %1061 = dma.vmem_to_hbm [thread:$0]  %s1059, 128, %s1056, [#allocation7]
        $region64: #{resnet_forward.1} parent=43 // pred_fallthru
          _
        // Predicated region
        $region65: #{resnet_forward.1} parent=43 // pred_check
          %p1062 = pneg %p243
        $region66: #{resnet_forward.1} parent=43 // pred_check_branch
          %1064 = sbr.rel (%p1062) target = $region68
        $region67: #{resnet_forward.1} parent=43 // pred_region
          %s1066 = ssub.s32 128, 128
          %1067 = vsyncadd %s1032, %s1066
          %s1068 = smul.addr %s27, 2
          %s1069 = smul.addr %s28, 2
          %s1070 = sadd.s32 %s1068, %s1069
          %s1071 = smul.addr %s1070, 64
          %s1072 = scalar_lea.hbm %s8, %s1071
          %s1074 = sshll.u32 %s1035, 4
          %s1075 = int_to_ptr.vmem [resolvable:$true] %s1074
          %1077 = dma.vmem_to_hbm [thread:$0]  %s1075, 128, %s1072, %s1032
        $region68: #{resnet_forward.1} parent=43 // pred_fallthru
          _
        // Predicated region
        $region69: #{resnet_forward.1} parent=43 // pred_check
          %p1078 = pneg %p189
        $region70: #{resnet_forward.1} parent=43 // pred_check_branch
          %1080 = sbr.rel (%p1078) target = $region72
        $region71: #{resnet_forward.1} parent=43 // pred_region
          %1081 = dma.done [#allocation5], 128
        $region72: #{resnet_forward.1} parent=43 // pred_fallthru
          _
        // Predicated region
        $region73: #{resnet_forward.1} parent=43 // pred_check
          %p1082 = pneg %p215
        $region74: #{resnet_forward.1} parent=43 // pred_check_branch
          %1084 = sbr.rel (%p1082) target = $region76
        $region75: #{resnet_forward.1} parent=43 // pred_region
          %1085 = dma.done [#allocation7], 128
        $region76: #{resnet_forward.1} parent=43 // pred_fallthru
          _
      $region44: #{resnet_forward.1} parent=5 // pred_fallthru
        _
      %p1086 = scmp.le.s32.totalorder 2, %s18
      // Predicated region
      $region77: #{resnet_forward.1} parent=5 // pred_check
        %p1087 = pneg %p1086
      $region78: #{resnet_forward.1} parent=5 // pred_check_branch
        %1089 = sbr.rel (%p1087) target = $region80
      $region79: #{resnet_forward.1} parent=5 // pred_region
        %s1090 = ssub.s32 %s18, 2
        // Predicated region
        $region81: #{resnet_forward.1} parent=79 // pred_check
          %p1091 = pneg %p249
        $region82: #{resnet_forward.1} parent=79 // pred_check_branch
          %1093 = sbr.rel (%p1091) target = $region84
        $region83: #{resnet_forward.1} parent=79 // pred_region
          %s1094 = sand.u32 %s24, 1
          %s1095 = scalar_lea.sflag [#allocation5], %s1094
          %s1096 = sand.u32 %s234, 1
          %s1097 = smul.addr %s1096, 8
          %s1098 = scalar_lea.vmem [#allocation8], %s1097
          %1099 = dma.done %s1095, 128
        $region84: #{resnet_forward.1} parent=79 // pred_fallthru
          _
      $region80: #{resnet_forward.1} parent=5 // pred_fallthru
        _
    $region6: #{resnet_forward.1} parent=1 // loop_footer
      %s22 = sadd.s32 1, %s18
    $region7: #{resnet_forward.1} parent=1 // loop_footer_branch
      %17 = sbr.rel target = $region3
    $region8: #{resnet_forward.1} parent=1 // loop_exit
      _
    %1100 = vsyncpa [#allocation5], 1
    %s1101 = scalar_lea.sflag [#allocation5], 1
    %1102 = vsyncpa %s1101, 1
    %1103 = vsyncpa [#allocation7], 1

</llo_original>
